<compile_context>
chip_gen: v7x
topology: tpu7x:2x2x1
jax: 0.10.0
libtpu: 0.0.40
codegen_flags: <defaults>
</compile_context>

<pallas_src>
import functools
import math

import jax
import jax.numpy as jnp
from jax import lax
from jax.experimental import pallas as pl
from jax.experimental.pallas import tpu as pltpu


def _attention_kernel(q_ref, k_ref, v_ref, *rest, scale, has_mask):
    """One (batch, head, q-block) of flash-style online-softmax attention."""
    if has_mask:
        mask_ref, o_ref, q_scr, m_scr, l_scr, acc_scr = rest
    else:
        o_ref, q_scr, m_scr, l_scr, acc_scr = rest

    ki = pl.program_id(3)

    @pl.when(ki == 0)
    def _init():
        # Hoist 1/sqrt(d) scaling of the resident Q block out of the KV loop;
        # keep it in the MXU dtype so the QK^T matmul stays bf16.
        q_scr[...] = (q_ref[...] * scale).astype(q_scr.dtype)
        m_scr[...] = jnp.full_like(m_scr, -1e30)
        l_scr[...] = jnp.zeros_like(l_scr)
        acc_scr[...] = jnp.zeros_like(acc_scr)

    # scores = (Q * scale) @ K^T : contract the head dim of both operands on
    # the MXU (no explicit transpose), f32 accumulation.
    s = lax.dot_general(q_scr[...], k_ref[...], (((1,), (1,)), ((), ())),
                        preferred_element_type=jnp.float32)
    if has_mask:
        # Additive mask block, broadcast (1, tk) or (tq, tk) in-register.
        s = s + mask_ref[...].astype(jnp.float32)

    # Online (flash) softmax update in f32.
    m_prev = m_scr[...]                                      # (tq, 1)
    m_new = jnp.maximum(m_prev, jnp.max(s, axis=-1, keepdims=True))
    alpha = jnp.exp(m_prev - m_new)                          # rescale old stats
    p = jnp.exp(s - m_new)                                   # (tq, tk) f32

    l_scr[...] = alpha * l_scr[...] + jnp.sum(p, axis=-1, keepdims=True)
    # TODO(synk): nn.Dropout in training mode would stochastically zero `p`
    # here (pltpu.prng_random_bits); inference-mode identity matches .eval().
    acc_scr[...] = alpha * acc_scr[...] + jnp.dot(
        p.astype(v_ref.dtype), v_ref[...], preferred_element_type=jnp.float32)
    m_scr[...] = m_new

    @pl.when(ki == pl.num_programs(3) - 1)
    def _finalize():
        # Exact f32 division (once per q-block).  The approximate EUP
        # reciprocal used previously exceeded the numerical tolerance.
        # TODO(synk): for D < 128 the store is lane-masked; packing heads into
        # a lane-dense output slab would help further but changes the layout.
        o_ref[...] = (acc_scr[...] / l_scr[...]).astype(o_ref.dtype)


def _pick_tile(extent, target, multiple):
    """Largest divisor of `extent` that is a multiple of `multiple` and
    <= target, falling back to the full extent (always a legal block size)."""
    best = None
    t = multiple
    while t <= min(extent, target):
        if extent % t == 0:
            best = t
        t += multiple
    return best if best is not None else extent


def _prepare_mask(attention_mask, B, H, Sq, Sk):
    """Normalize an additive mask broadcastable to (B, H, Sq, Sk) into a 4-D
    f32 array whose dims are each 1 or the full extent (last dim == Sk).  The
    (B, H, Sq, Sk) tensor is never materialized unless the caller passed one."""
    m = jnp.asarray(attention_mask, dtype=jnp.float32)
    if m.ndim > 4:
        raise ValueError(f"attention_mask rank {m.ndim} > 4 is unsupported")
    m = m.reshape((1,) * (4 - m.ndim) + m.shape)
    mb, mh, mq, mk = m.shape
    if mk == 1:
        m = jnp.broadcast_to(m, (mb, mh, mq, Sk))
        mk = Sk
    if mb not in (1, B) or mh not in (1, H) or mq not in (1, Sq) or mk != Sk:
        raise ValueError(
            f"attention_mask shape {tuple(jnp.shape(attention_mask))} is not "
            f"broadcastable to (B={B}, H={H}, Sq={Sq}, Sk={Sk})")
    return m


def base_attention_product(query_layer, key_layer, value_layer,
                           attention_mask=None, *,
                           compute_dtype=jnp.bfloat16,
                           q_tile_target=512, kv_tile_target=1024):
    """softmax(Q @ K^T / sqrt(d) + mask) @ V via a flash-style Pallas kernel.

    query_layer: (B, H, Sq, D); key_layer/value_layer: (B, H, Sk, D)
    attention_mask: additive mask broadcastable to (B, H, Sq, Sk), or None.
    Returns (B, H, Sq, D) in query_layer.dtype.
    """
    B, H, Sq, D = query_layer.shape
    Sk = key_layer.shape[2]
    out_dtype = query_layer.dtype

    # bf16 MXU operands: halves K/V HBM traffic and roughly doubles matmul
    # throughput vs f32 on every TPU generation; softmax math stays f32.
    q = query_layer.astype(compute_dtype)
    k = key_layer.astype(compute_dtype)
    v = value_layer.astype(compute_dtype)

    # Query tiles on sublane granularity (8), key tiles on lane granularity
    # (128).  Larger tiles raise the FLOP/byte of the re-streamed K/V operands
    # (roofline break-even: ~256 v5e, ~384 v7x, ~700 v6e) and amortize the
    # ~0.35us per-grid-step overhead; VMEM stays in the single-MiB range.
    tq = _pick_tile(Sq, q_tile_target, 8)
    tk = _pick_tile(Sk, kv_tile_target, 128)
    # TODO(synk): no padding/ragged path — if Sq/Sk have no suitable divisor we
    # fall back to full-extent tiles, which can exhaust VMEM for very long,
    # indivisible sequences.
    n_q = Sq // tq
    n_k = Sk // tk

    in_specs = [
        pl.BlockSpec((None, None, tq, D), lambda b, h, qi, ki: (b, h, qi, 0)),
        pl.BlockSpec((None, None, tk, D), lambda b, h, qi, ki: (b, h, ki, 0)),
        pl.BlockSpec((None, None, tk, D), lambda b, h, qi, ki: (b, h, ki, 0)),
    ]
    operands = [q, k, v]

    has_mask = attention_mask is not None
    if has_mask:
        mask = _prepare_mask(attention_mask, B, H, Sq, Sk)
        mb, mh, mq, _ = mask.shape
        mask_spec = pl.BlockSpec(
            (None, None, tq if mq != 1 else 1, tk),
            lambda b, h, qi, ki, _b=(mb != 1), _h=(mh != 1), _q=(mq != 1): (
                b if _b else 0, h if _h else 0, qi if _q else 0, ki))
        in_specs.append(mask_spec)
        operands.append(mask)
    # TODO(synk): fully padded trailing KV blocks could be skipped via a
    # scalar-prefetched per-batch kv_len and pl.when; not implemented here.

    kernel = functools.partial(_attention_kernel, scale=1.0 / math.sqrt(D),
                               has_mask=has_mask)

    return pl.pallas_call(
        kernel,
        out_shape=jax.ShapeDtypeStruct((B, H, Sq, D), out_dtype),
        grid_spec=pltpu.PrefetchScalarGridSpec(
            num_scalar_prefetch=0,
            grid=(B, H, n_q, n_k),
            in_specs=in_specs,
            out_specs=pl.BlockSpec((None, None, tq, D),
                                   lambda b, h, qi, ki: (b, h, qi, 0)),
            scratch_shapes=[
                pltpu.VMEM((tq, D), compute_dtype),   # scaled Q (hoisted)
                pltpu.VMEM((tq, 1), jnp.float32),     # running max m
                pltpu.VMEM((tq, 1), jnp.float32),     # running denom l
                pltpu.VMEM((tq, D), jnp.float32),     # output accumulator
            ],
        ),
        compiler_params=pltpu.CompilerParams(
            dimension_semantics=("parallel", "parallel", "parallel", "arbitrary"),
        ),
    )(*operands)


def _reference(query_layer, key_layer, value_layer, attention_mask=None):
    d = query_layer.shape[-1]
    scores = jnp.einsum("bhqd,bhkd->bhqk", query_layer, key_layer) / math.sqrt(d)
    if attention_mask is not None:
        scores = scores + jnp.asarray(attention_mask, dtype=scores.dtype)
    probs = jax.nn.softmax(scores, axis=-1)
    return jnp.einsum("bhqk,bhkd->bhqd", probs, value_layer)


if __name__ == "__main__":
    B, H, S, D = 2, 4, 16, 32

    key = jax.random.PRNGKey(0)
    kq, kk, kv = jax.random.split(key, 3)
    q = jax.random.normal(kq, (B, H, S, D), dtype=jnp.float32)
    k = jax.random.normal(kk, (B, H, S, D), dtype=jnp.float32)
    v = jax.random.normal(kv, (B, H, S, D), dtype=jnp.float32)

    # Tolerance covers the bf16 cast of the MXU operands (softmax in f32).
    ATOL = RTOL = 3e-2

    # 1) MBart-style additive key-padding mask (B, 1, 1, Sk).
    pad = jnp.zeros((B, 1, 1, S), dtype=jnp.float32)
    pad = pad.at[1, :, :, S - 3:].set(-1e9)
    out = jax.block_until_ready(base_attention_product(q, k, v, pad))
    ref = _reference(q, k, v, pad)
    assert out.shape == ref.shape and out.dtype == jnp.float32
    assert jnp.allclose(out, ref, atol=ATOL, rtol=RTOL), "padding-mask mismatch"

    # 2) No-mask fast path (mask input and add are compiled out).
    out = jax.block_until_ready(base_attention_product(q, k, v, None))
    ref = _reference(q, k, v, None)
    assert jnp.allclose(out, ref, atol=ATOL, rtol=RTOL), "no-mask mismatch"

    # 3) General (1, 1, Sq, Sk) additive mask (e.g. causal).
    causal = jnp.where(jnp.tril(jnp.ones((S, S), dtype=bool)), 0.0, -1e9)
    causal = causal.astype(jnp.float32)[None, None]
    out = jax.block_until_ready(base_attention_product(q, k, v, causal))
    ref = _reference(q, k, v, causal)
    assert jnp.allclose(out, ref, atol=ATOL, rtol=RTOL), "causal-mask mismatch"

    print("KERNEL_OK")
</pallas_src>

<mosaic_0001>
module attributes {stable_mosaic.version = 11 : i64} {
  func.func @_attention_kernel(%arg0: i32, %arg1: i32, %arg2: i32, %arg3: i32, %arg4: memref<1x1x16x32xbf16, #tpu.memory_space<vmem>>, %arg5: memref<1x1x16x32xbf16, #tpu.memory_space<vmem>>, %arg6: memref<1x1x16x32xbf16, #tpu.memory_space<vmem>>, %arg7: memref<1x1x1x16xf32, #tpu.memory_space<vmem>>, %arg8: memref<1x1x16x32xf32, #tpu.memory_space<vmem>>, %arg9: memref<16x32xbf16, #tpu.memory_space<vmem>>, %arg10: memref<16x1xf32, #tpu.memory_space<vmem>>, %arg11: memref<16x1xf32, #tpu.memory_space<vmem>>, %arg12: memref<16x32xf32, #tpu.memory_space<vmem>>) attributes {dimension_semantics = [#tpu.dimension_semantics<parallel>, #tpu.dimension_semantics<parallel>, #tpu.dimension_semantics<parallel>, #tpu.dimension_semantics<arbitrary>], iteration_bounds = array<i64: 2, 4, 1, 1>, scalar_prefetch = 0 : i64, scratch_operands = 4 : i64, tpu.core_type = #tpu.core_type<tc>, window_params = [{transform_indices = @transform_0, window_bounds = array<i64: 1, 1, 16, 32>}, {transform_indices = @transform_1, window_bounds = array<i64: 1, 1, 16, 32>}, {transform_indices = @transform_2, window_bounds = array<i64: 1, 1, 16, 32>}, {transform_indices = @transform_3, window_bounds = array<i64: 1, 1, 1, 16>}, {transform_indices = @transform_4, window_bounds = array<i64: 1, 1, 16, 32>}]} {
    %c0_i32 = arith.constant 0 : i32
    %0 = arith.cmpi eq, %arg3, %c0_i32 : i32
    %1 = arith.extui %0 : i1 to i32
    %c0_i32_0 = arith.constant 0 : i32
    %2 = arith.cmpi ne, %1, %c0_i32_0 : i32
    scf.if %2 {
      %c0_31 = arith.constant 0 : index
      %c0_32 = arith.constant 0 : index
      %c0_33 = arith.constant 0 : index
      %c0_34 = arith.constant 0 : index
      %39 = vector.load %arg4[%c0_31, %c0_32, %c0_33, %c0_34] : memref<1x1x16x32xbf16, #tpu.memory_space<vmem>>, vector<1x1x16x32xbf16>
      %40 = vector.shape_cast %39 : vector<1x1x16x32xbf16> to vector<16x32xbf16>
      %cst_35 = arith.constant 1.767580e-01 : bf16
      %41 = vector.broadcast %cst_35 : bf16 to vector<16x32xbf16>
      %42 = arith.mulf %40, %41 : vector<16x32xbf16>
      %c0_36 = arith.constant 0 : index
      %c0_37 = arith.constant 0 : index
      %43 = vector.load %arg9[%c0_36, %c0_37] : memref<16x32xbf16, #tpu.memory_space<vmem>>, vector<16x32xbf16>
      tpu.vector_store %arg9[%c0_36, %c0_37], %42 {strides = array<i32>} : memref<16x32xbf16, #tpu.memory_space<vmem>>, vector<16x32xbf16>,
      %cst_38 = arith.constant -1.000000e+30 : f32
      %44 = vector.broadcast %cst_38 : f32 to vector<16x1xf32>
      %c0_39 = arith.constant 0 : index
      %c0_40 = arith.constant 0 : index
      %45 = vector.load %arg10[%c0_39, %c0_40] : memref<16x1xf32, #tpu.memory_space<vmem>>, vector<16x1xf32>
      tpu.vector_store %arg10[%c0_39, %c0_40], %44 {strides = array<i32>} : memref<16x1xf32, #tpu.memory_space<vmem>>, vector<16x1xf32>,
      %cst_41 = arith.constant 0.000000e+00 : f32
      %46 = vector.broadcast %cst_41 : f32 to vector<16x1xf32>
      %c0_42 = arith.constant 0 : index
      %c0_43 = arith.constant 0 : index
      %47 = vector.load %arg11[%c0_42, %c0_43] : memref<16x1xf32, #tpu.memory_space<vmem>>, vector<16x1xf32>
      tpu.vector_store %arg11[%c0_42, %c0_43], %46 {strides = array<i32>} : memref<16x1xf32, #tpu.memory_space<vmem>>, vector<16x1xf32>,
      %cst_44 = arith.constant 0.000000e+00 : f32
      %48 = vector.broadcast %cst_44 : f32 to vector<16x32xf32>
      %c0_45 = arith.constant 0 : index
      %c0_46 = arith.constant 0 : index
      %49 = vector.load %arg12[%c0_45, %c0_46] : memref<16x32xf32, #tpu.memory_space<vmem>>, vector<16x32xf32>
      tpu.vector_store %arg12[%c0_45, %c0_46], %48 {strides = array<i32>} : memref<16x32xf32, #tpu.memory_space<vmem>>, vector<16x32xf32>,
    } else {
    }
    %c0 = arith.constant 0 : index
    %c0_1 = arith.constant 0 : index
    %3 = vector.load %arg9[%c0, %c0_1] : memref<16x32xbf16, #tpu.memory_space<vmem>>, vector<16x32xbf16>
    %c0_2 = arith.constant 0 : index
    %c0_3 = arith.constant 0 : index
    %c0_4 = arith.constant 0 : index
    %c0_5 = arith.constant 0 : index
    %4 = vector.load %arg5[%c0_2, %c0_3, %c0_4, %c0_5] : memref<1x1x16x32xbf16, #tpu.memory_space<vmem>>, vector<1x1x16x32xbf16>
    %5 = vector.shape_cast %4 : vector<1x1x16x32xbf16> to vector<16x32xbf16>
    %cst = arith.constant dense<0.000000e+00> : vector<16x16xf32>
    %6 = tpu.matmul %3, %5, %cst {dimension_numbers = #tpu.dot_dimension_numbers<[1], [1], [0], [0], [0, 0, 1, 0], [], []>} : vector<16x32xbf16>, vector<16x32xbf16>, vector<16x16xf32> -> vector<16x16xf32>
    %c0_6 = arith.constant 0 : index
    %c0_7 = arith.constant 0 : index
    %c0_8 = arith.constant 0 : index
    %c0_9 = arith.constant 0 : index
    %7 = vector.load %arg7[%c0_6, %c0_7, %c0_8, %c0_9] : memref<1x1x1x16xf32, #tpu.memory_space<vmem>>, vector<1x1x1x16xf32>
    %8 = vector.shape_cast %7 : vector<1x1x1x16xf32> to vector<1x16xf32>
    %9 = vector.broadcast %8 : vector<1x16xf32> to vector<16x16xf32>
    %10 = arith.addf %6, %9 : vector<16x16xf32>
    %c0_10 = arith.constant 0 : index
    %c0_11 = arith.constant 0 : index
    %11 = vector.load %arg10[%c0_10, %c0_11] : memref<16x1xf32, #tpu.memory_space<vmem>>, vector<16x1xf32>
    %cst_12 = arith.constant dense<0xFF800000> : vector<16xf32>
    %12 = vector.multi_reduction <maximumf>, %10, %cst_12 [1] : vector<16x16xf32> to vector<16xf32>
    %13 = vector.shape_cast %12 : vector<16xf32> to vector<16x1xf32>
    %14 = arith.maximumf %11, %13 : vector<16x1xf32>
    %15 = arith.subf %11, %14 : vector<16x1xf32>
    %16 = math.exp %15 : vector<16x1xf32>
    %17 = vector.broadcast %14 : vector<16x1xf32> to vector<16x16xf32>
    %18 = arith.subf %10, %17 : vector<16x16xf32>
    %19 = math.exp %18 : vector<16x16xf32>
    %c0_13 = arith.constant 0 : index
    %c0_14 = arith.constant 0 : index
    %20 = vector.load %arg11[%c0_13, %c0_14] : memref<16x1xf32, #tpu.memory_space<vmem>>, vector<16x1xf32>
    %21 = arith.mulf %16, %20 : vector<16x1xf32>
    %cst_15 = arith.constant dense<0.000000e+00> : vector<16xf32>
    %22 = vector.multi_reduction <add>, %19, %cst_15 [1] : vector<16x16xf32> to vector<16xf32>
    %23 = vector.shape_cast %22 : vector<16xf32> to vector<16x1xf32>
    %24 = arith.addf %21, %23 : vector<16x1xf32>
    %c0_16 = arith.constant 0 : index
    %c0_17 = arith.constant 0 : index
    %25 = vector.load %arg11[%c0_16, %c0_17] : memref<16x1xf32, #tpu.memory_space<vmem>>, vector<16x1xf32>
    tpu.vector_store %arg11[%c0_16, %c0_17], %24 {strides = array<i32>} : memref<16x1xf32, #tpu.memory_space<vmem>>, vector<16x1xf32>,
    %c0_18 = arith.constant 0 : index
    %c0_19 = arith.constant 0 : index
    %26 = vector.load %arg12[%c0_18, %c0_19] : memref<16x32xf32, #tpu.memory_space<vmem>>, vector<16x32xf32>
    %27 = vector.broadcast %16 : vector<16x1xf32> to vector<16x32xf32>
    %28 = arith.mulf %27, %26 : vector<16x32xf32>
    %29 = arith.truncf %19 : vector<16x16xf32> to vector<16x16xbf16>
    %c0_20 = arith.constant 0 : index
    %c0_21 = arith.constant 0 : index
    %c0_22 = arith.constant 0 : index
    %c0_23 = arith.constant 0 : index
    %30 = vector.load %arg6[%c0_20, %c0_21, %c0_22, %c0_23] : memref<1x1x16x32xbf16, #tpu.memory_space<vmem>>, vector<1x1x16x32xbf16>
    %31 = vector.shape_cast %30 : vector<1x1x16x32xbf16> to vector<16x32xbf16>
    %cst_24 = arith.constant dense<0.000000e+00> : vector<16x32xf32>
    %32 = tpu.matmul %29, %31, %cst_24 {dimension_numbers = #tpu.dot_dimension_numbers<[1], [0], [0], [1], [0, 0, 1, 1], [], []>} : vector<16x16xbf16>, vector<16x32xbf16>, vector<16x32xf32> -> vector<16x32xf32>
    %33 = arith.addf %28, %32 : vector<16x32xf32>
    %c0_25 = arith.constant 0 : index
    %c0_26 = arith.constant 0 : index
    %34 = vector.load %arg12[%c0_25, %c0_26] : memref<16x32xf32, #tpu.memory_space<vmem>>, vector<16x32xf32>
    tpu.vector_store %arg12[%c0_25, %c0_26], %33 {strides = array<i32>} : memref<16x32xf32, #tpu.memory_space<vmem>>, vector<16x32xf32>,
    %c0_27 = arith.constant 0 : index
    %c0_28 = arith.constant 0 : index
    %35 = vector.load %arg10[%c0_27, %c0_28] : memref<16x1xf32, #tpu.memory_space<vmem>>, vector<16x1xf32>
    tpu.vector_store %arg10[%c0_27, %c0_28], %14 {strides = array<i32>} : memref<16x1xf32, #tpu.memory_space<vmem>>, vector<16x1xf32>,
    %c0_i32_29 = arith.constant 0 : i32
    %36 = arith.cmpi eq, %arg3, %c0_i32_29 : i32
    %37 = arith.extui %36 : i1 to i32
    %c0_i32_30 = arith.constant 0 : i32
    %38 = arith.cmpi ne, %37, %c0_i32_30 : i32
    scf.if %38 {
      %c0_31 = arith.constant 0 : index
      %c0_32 = arith.constant 0 : index
      %39 = vector.load %arg12[%c0_31, %c0_32] : memref<16x32xf32, #tpu.memory_space<vmem>>, vector<16x32xf32>
      %c0_33 = arith.constant 0 : index
      %c0_34 = arith.constant 0 : index
      %40 = vector.load %arg11[%c0_33, %c0_34] : memref<16x1xf32, #tpu.memory_space<vmem>>, vector<16x1xf32>
      %41 = vector.broadcast %40 : vector<16x1xf32> to vector<16x32xf32>
      %42 = arith.divf %39, %41 : vector<16x32xf32>
      %c0_35 = arith.constant 0 : index
      %c0_36 = arith.constant 0 : index
      %c0_37 = arith.constant 0 : index
      %c0_38 = arith.constant 0 : index
      %43 = vector.load %arg8[%c0_35, %c0_36, %c0_37, %c0_38] : memref<1x1x16x32xf32, #tpu.memory_space<vmem>>, vector<1x1x16x32xf32>
      %44 = vector.shape_cast %43 : vector<1x1x16x32xf32> to vector<16x32xf32>
      %45 = vector.shape_cast %42 : vector<16x32xf32> to vector<1x1x16x32xf32>
      tpu.vector_store %arg8[%c0_35, %c0_36, %c0_37, %c0_38], %45 {strides = array<i32>} : memref<1x1x16x32xf32, #tpu.memory_space<vmem>>, vector<1x1x16x32xf32>,
    } else {
    }
    return
  }
  func.func @transform_0(%arg0: i32, %arg1: i32, %arg2: i32, %arg3: i32) -> (i32, i32, i32, i32) {
    %c0_i32 = arith.constant 0 : i32
    %c0_i32_0 = arith.constant 0 : i32
    return %arg0, %arg1, %arg2, %c0_i32 : i32, i32, i32, i32
  }
  func.func @transform_1(%arg0: i32, %arg1: i32, %arg2: i32, %arg3: i32) -> (i32, i32, i32, i32) {
    %c0_i32 = arith.constant 0 : i32
    %c0_i32_0 = arith.constant 0 : i32
    return %arg0, %arg1, %arg3, %c0_i32 : i32, i32, i32, i32
  }
  func.func @transform_2(%arg0: i32, %arg1: i32, %arg2: i32, %arg3: i32) -> (i32, i32, i32, i32) {
    %c0_i32 = arith.constant 0 : i32
    %c0_i32_0 = arith.constant 0 : i32
    return %arg0, %arg1, %arg3, %c0_i32 : i32, i32, i32, i32
  }
  func.func @transform_3(%arg0: i32, %arg1: i32, %arg2: i32, %arg3: i32) -> (i32, i32, i32, i32) {
    %c0_i32 = arith.constant 0 : i32
    %c0_i32_0 = arith.constant 0 : i32
    %c0_i32_1 = arith.constant 0 : i32
    return %arg0, %c0_i32, %c0_i32_0, %arg3 : i32, i32, i32, i32
  }
  func.func @transform_4(%arg0: i32, %arg1: i32, %arg2: i32, %arg3: i32) -> (i32, i32, i32, i32) {
    %c0_i32 = arith.constant 0 : i32
    %c0_i32_0 = arith.constant 0 : i32
    return %arg0, %arg1, %arg2, %c0_i32 : i32, i32, i32, i32
  }
}

</mosaic_0001>

<llo_original>
// kernel: tpu_custom_call.1
$region0: #{tpu_custom_call.1}
  #allocation0 [shape = 'u32[]', space=smem, size = 0x4, offset = 0x4, fixed_abs, tag = 'smem constant byte address 0x4 - core index']
  #allocation1 [shape = 'u32[144,128]{1,0:T(1,128)}', space=vmem, size = 0x12000, scoped, tag = 'internal scratch']
  #allocation2 [shape = 'bf16[16,32]{1,0:T(16,128)(2,1)}', space=vmem, size = 0x1000, scoped, tag = 'scratch operand']
  #allocation3 [shape = 'f32[16,1]{1,0:T(8,128)}', space=vmem, size = 0x2000, scoped, tag = 'scratch operand']
  #allocation4 [shape = 'f32[16,1]{1,0:T(8,128)}', space=vmem, size = 0x2000, scoped, tag = 'scratch operand']
  #allocation5 [shape = 'f32[16,32]{1,0:T(8,128)}', space=vmem, size = 0x2000, scoped, tag = 'scratch operand']
  %s0 = inlined_call_operand.hbm [shape: bf16[2,4,16,32], index: 0, kind: input, shape index: {}]
  %s1 = inlined_call_operand.hbm [shape: bf16[2,4,16,32], index: 1, kind: input, shape index: {}]
  %s2 = inlined_call_operand.hbm [shape: bf16[2,4,16,32], index: 2, kind: input, shape index: {}]
  %s3 = inlined_call_operand.vmem [shape: f32[2,1,1,16], index: 3, kind: input, shape index: {}]
  %s4 = inlined_call_operand.hbm [shape: f32[2,4,16,32], index: 4, kind: output, shape index: {}]
  %s5 = sld [smem:[#allocation0]]
  $region69: #{tpu_custom_call.1} parent=0
    _
  %s7 = ssub.s32 1, %s5
  %s8 = scalar_select 0, %s7, %s5
  $region1: #{tpu_custom_call.1} parent=0
    #allocation6 [shape = 'u8[8192]{0}', space=vmem, size = 0x2000, scoped, tag = 'input window, operand 0']
    #allocation7 [shape = 's32[2]{0}', space=sflag, size = 0x8, scoped, tag = 'scoped memory for tpu_custom_call.1']
    #allocation8 [shape = 's32[2]{0}', space=sflag, size = 0x8, scoped, tag = 'scoped memory for tpu_custom_call.1']
    #allocation9 [shape = 'u8[8192]{0}', space=vmem, size = 0x2000, scoped, tag = 'input window, operand 1']
    #allocation10 [shape = 's32[2]{0}', space=sflag, size = 0x8, scoped, tag = 'scoped memory for tpu_custom_call.1']
    #allocation11 [shape = 'u8[8192]{0}', space=vmem, size = 0x2000, scoped, tag = 'input window, operand 2']
    #allocation12 [shape = 'u8[16384]{0}', space=vmem, size = 0x4000, scoped, tag = 'output window, operand 0']
    %9 = vsyncpa [#allocation7], 0
    %s10 = scalar_lea.sflag [#allocation7], 1
    %11 = vsyncpa %s10, 0
    %12 = vsyncpa [#allocation10], 0
    %s13 = scalar_lea.sflag [#allocation10], 1
    %14 = vsyncpa %s13, 0
    %15 = vsyncpa [#allocation8], 0
    %s16 = scalar_lea.sflag [#allocation8], 1
    %17 = vsyncpa %s16, 0
    loop: start=0, step=1, limit=10
    $region2: #{tpu_custom_call.1} parent=1 // loop_pre_header
      _
    $region3: #{tpu_custom_call.1} parent=1 // loop_header
      %s19 = sphi 0, %s23
      %p20 = scmp.ge.s32.totalorder %s19, 10
      %s26 = sphi 0, %s52
      %s27 = sphi 0, %s48
      %s28 = sphi 0, %s44
      %s29 = sphi 0, %s40
      %s30 = sphi 0, %s26
      %s31 = sphi 0, %s27
      %s32 = sphi 0, %s28
      %s33 = sphi 0, %s29
      %s34 = sphi 0, %s30
      %s35 = sphi 0, %s31
      %s36 = sphi 0, %s32
      %s37 = sphi 0, %s33
      %s59 = sphi 0, %s61
      %s62 = sphi 0, %s59
      %s63 = sphi 0, %s62
      %s79 = sphi 0, %s63
      %s89 = sphi 0, %s91
      %s92 = sphi 0, %s89
      %s93 = sphi 0, %s92
      %s109 = sphi 0, %s93
      %s119 = sphi 0, %s121
      %s122 = sphi 0, %s119
      %s123 = sphi 0, %s122
      %s139 = sphi 0, %s123
      %s147 = sphi 0, %s149
      %s150 = sphi 0, %s147
      %s151 = sphi 0, %s150
      %s167 = sphi 0, %s151
      %s177 = sphi 0, %s179
      %s180 = sphi 0, %s177
      %s181 = sphi 0, %s180
      %s197 = sphi 0, %s181
    $region4: #{tpu_custom_call.1} parent=1 // loop_header_branch
      %22 = sbr.rel (%p20) target = $region8
    $region5: #{tpu_custom_call.1} parent=1 // loop_body
      %s24 = ssub.s32 %s19, 1
      %s25 = ssub.s32 %s19, 2
      %s38 = sadd.s32 1, %s29
      %p39 = scmp.ge.s32.totalorder %s38, 1
      %s40 = scalar_select %p39, 0, %s38
      %s41 = sadd.s32 1, %s28
      %s42 = scalar_select %p39, %s41, %s28
      %p43 = scmp.ge.s32.totalorder %s42, 1
      %s44 = scalar_select %p43, 0, %s42
      %s45 = sadd.s32 1, %s27
      %s46 = scalar_select %p43, %s45, %s27
      %p47 = scmp.ge.s32.totalorder %s46, 4
      %s48 = scalar_select %p47, 0, %s46
      %s49 = sadd.s32 1, %s26
      %s50 = scalar_select %p47, %s49, %s26
      %p51 = scmp.ge.s32.totalorder %s50, 2
      %s52 = scalar_select %p51, 0, %s50
      %s53 = ssub.s32 %s26, %s52
      %s54 = ssub.s32 %s27, %s48
      %s55 = sor.u32 %s53, %s54
      %s56 = ssub.s32 %s28, %s44
      %s57 = sor.u32 %s55, %s56
      %p58 = scmp.eq.s32.totalorder %s57, 0
      %s60 = sadd.s32 %s59, 1
      %s61 = scalar_select %p58, %s59, %s60
      %p64 = pneg %p58
      %p65 = scmp.eq.s32.totalorder %s19, 7
      %p66 = por %p64, %p65
      %p67 = scmp.ne.s32.totalorder %s59, %s62
      %p68 = scmp.eq.s32.totalorder %s19, 0
      %p69 = por %p67, %p68
      %p70 = scmp.ne.s32.totalorder %s59, %s62
      %p71 = scmp.eq.s32.totalorder %s24, 7
      %p72 = por %p70, %p71
      %p73 = scmp.ne.s32.totalorder %s62, %s63
      %p74 = scmp.eq.s32.totalorder %s24, 0
      %p75 = por %p73, %p74
      %p76 = scmp.ne.s32.totalorder %s62, %s63
      %p77 = scmp.eq.s32.totalorder %s25, 7
      %p78 = por %p76, %p77
      %p80 = scmp.ne.s32.totalorder %s63, %s79
      %p81 = scmp.eq.s32.totalorder %s25, 0
      %p82 = por %p80, %p81
      %s83 = ssub.s32 %s26, %s52
      %s84 = ssub.s32 %s27, %s48
      %s85 = sor.u32 %s83, %s84
      %s86 = ssub.s32 %s29, %s40
      %s87 = sor.u32 %s85, %s86
      %p88 = scmp.eq.s32.totalorder %s87, 0
      %s90 = sadd.s32 %s89, 1
      %s91 = scalar_select %p88, %s89, %s90
      %p94 = pneg %p88
      %p95 = scmp.eq.s32.totalorder %s19, 7
      %p96 = por %p94, %p95
      %p97 = scmp.ne.s32.totalorder %s89, %s92
      %p98 = scmp.eq.s32.totalorder %s19, 0
      %p99 = por %p97, %p98
      %p100 = scmp.ne.s32.totalorder %s89, %s92
      %p101 = scmp.eq.s32.totalorder %s24, 7
      %p102 = por %p100, %p101
      %p103 = scmp.ne.s32.totalorder %s92, %s93
      %p104 = scmp.eq.s32.totalorder %s24, 0
      %p105 = por %p103, %p104
      %p106 = scmp.ne.s32.totalorder %s92, %s93
      %p107 = scmp.eq.s32.totalorder %s25, 7
      %p108 = por %p106, %p107
      %p110 = scmp.ne.s32.totalorder %s93, %s109
      %p111 = scmp.eq.s32.totalorder %s25, 0
      %p112 = por %p110, %p111
      %s113 = ssub.s32 %s26, %s52
      %s114 = ssub.s32 %s27, %s48
      %s115 = sor.u32 %s113, %s114
      %s116 = ssub.s32 %s29, %s40
      %s117 = sor.u32 %s115, %s116
      %p118 = scmp.eq.s32.totalorder %s117, 0
      %s120 = sadd.s32 %s119, 1
      %s121 = scalar_select %p118, %s119, %s120
      %p124 = pneg %p118
      %p125 = scmp.eq.s32.totalorder %s19, 7
      %p126 = por %p124, %p125
      %p127 = scmp.ne.s32.totalorder %s119, %s122
      %p128 = scmp.eq.s32.totalorder %s19, 0
      %p129 = por %p127, %p128
      %p130 = scmp.ne.s32.totalorder %s119, %s122
      %p131 = scmp.eq.s32.totalorder %s24, 7
      %p132 = por %p130, %p131
      %p133 = scmp.ne.s32.totalorder %s122, %s123
      %p134 = scmp.eq.s32.totalorder %s24, 0
      %p135 = por %p133, %p134
      %p136 = scmp.ne.s32.totalorder %s122, %s123
      %p137 = scmp.eq.s32.totalorder %s25, 7
      %p138 = por %p136, %p137
      %p140 = scmp.ne.s32.totalorder %s123, %s139
      %p141 = scmp.eq.s32.totalorder %s25, 0
      %p142 = por %p140, %p141
      %s143 = ssub.s32 %s26, %s52
      %s144 = ssub.s32 %s29, %s40
      %s145 = sor.u32 %s143, %s144
      %p146 = scmp.eq.s32.totalorder %s145, 0
      %s148 = sadd.s32 %s147, 1
      %s149 = scalar_select %p146, %s147, %s148
      %p152 = pneg %p146
      %p153 = scmp.eq.s32.totalorder %s19, 7
      %p154 = por %p152, %p153
      %p155 = scmp.ne.s32.totalorder %s147, %s150
      %p156 = scmp.eq.s32.totalorder %s19, 0
      %p157 = por %p155, %p156
      %p158 = scmp.ne.s32.totalorder %s147, %s150
      %p159 = scmp.eq.s32.totalorder %s24, 7
      %p160 = por %p158, %p159
      %p161 = scmp.ne.s32.totalorder %s150, %s151
      %p162 = scmp.eq.s32.totalorder %s24, 0
      %p163 = por %p161, %p162
      %p164 = scmp.ne.s32.totalorder %s150, %s151
      %p165 = scmp.eq.s32.totalorder %s25, 7
      %p166 = por %p164, %p165
      %p168 = scmp.ne.s32.totalorder %s151, %s167
      %p169 = scmp.eq.s32.totalorder %s25, 0
      %p170 = por %p168, %p169
      %s171 = ssub.s32 %s26, %s52
      %s172 = ssub.s32 %s27, %s48
      %s173 = sor.u32 %s171, %s172
      %s174 = ssub.s32 %s28, %s44
      %s175 = sor.u32 %s173, %s174
      %p176 = scmp.eq.s32.totalorder %s175, 0
      %s178 = sadd.s32 %s177, 1
      %s179 = scalar_select %p176, %s177, %s178
      %p182 = pneg %p176
      %p183 = scmp.eq.s32.totalorder %s19, 7
      %p184 = por %p182, %p183
      %p185 = scmp.ne.s32.totalorder %s177, %s180
      %p186 = scmp.eq.s32.totalorder %s19, 0
      %p187 = por %p185, %p186
      %p188 = scmp.ne.s32.totalorder %s177, %s180
      %p189 = scmp.eq.s32.totalorder %s24, 7
      %p190 = por %p188, %p189
      %p191 = scmp.ne.s32.totalorder %s180, %s181
      %p192 = scmp.eq.s32.totalorder %s24, 0
      %p193 = por %p191, %p192
      %p194 = scmp.ne.s32.totalorder %s180, %s181
      %p195 = scmp.eq.s32.totalorder %s25, 7
      %p196 = por %p194, %p195
      %p198 = scmp.ne.s32.totalorder %s181, %s197
      %p199 = scmp.eq.s32.totalorder %s25, 0
      %p200 = por %p198, %p199
      %p201 = scmp.le.s32.totalorder 1, %s19
      %p202 = scmp.lt.s32.totalorder %s19, 9
      %p203 = pnand %p201, %p202
      %p204 = pneg %p203
      // Predicated region
      $region9: #{tpu_custom_call.1} parent=5 // pred_check
        _
      $region10: #{tpu_custom_call.1} parent=5 // pred_check_branch
        %206 = sbr.rel (%p203) target = $region12
      $region11: #{tpu_custom_call.1} parent=5 // pred_region
        %s207 = ssub.s32 %s19, 1
      $region12: #{tpu_custom_call.1} parent=5 // pred_fallthru
        _
      %p208 = scmp.lt.s32.totalorder %s19, 8
      // Predicated region
      $region13: #{tpu_custom_call.1} parent=5 // pred_check
        %p209 = pneg %p208
      $region14: #{tpu_custom_call.1} parent=5 // pred_check_branch
        %211 = sbr.rel (%p209) target = $region16
      $region15: #{tpu_custom_call.1} parent=5 // pred_region
        // Predicated region
        $region17: #{tpu_custom_call.1} parent=15 // pred_check
          %p212 = pneg %p69
        $region18: #{tpu_custom_call.1} parent=15 // pred_check_branch
          %214 = sbr.rel (%p212) target = $region20
        $region19: #{tpu_custom_call.1} parent=15 // pred_region
          %s215 = sand.u32 %s59, 1
          %s216 = scalar_lea.sflag [#allocation7], %s215
          %s217 = sand.u32 %s59, 1
          %s218 = smul.addr %s217, 8
          %s219 = scalar_lea.vmem [#allocation6], %s218
          %s220 = smul.u32 2, %s28
          %s222 = ssub.s32 128, 128
          %223 = vsyncadd %s216, %s222
          %s224 = smul.addr %s27, 2
          %s225 = sadd.s32 %s220, %s224
          %s226 = smul.addr %s26, 8
          %s227 = sadd.s32 %s225, %s226
          %s228 = smul.addr %s227, 64
          %s229 = scalar_lea.hbm %s0, %s228
          %s230 = sshll.u32 %s219, 4
          %s231 = int_to_ptr.vmem [resolvable:$true] %s230
          %236 = dma.hbm_to_vmem [thread:$0]  %s229, 128, %s231, %s216, 64, 64, 4
        $region20: #{tpu_custom_call.1} parent=15 // pred_fallthru
          _
        // Predicated region
        $region21: #{tpu_custom_call.1} parent=15 // pred_check
          %p237 = pneg %p99
        $region22: #{tpu_custom_call.1} parent=15 // pred_check_branch
          %239 = sbr.rel (%p237) target = $region24
        $region23: #{tpu_custom_call.1} parent=15 // pred_region
          %s240 = sand.u32 %s19, 1
          %s241 = scalar_lea.sflag [#allocation10], %s240
          %s242 = sand.u32 %s89, 1
          %s243 = smul.addr %s242, 8
          %s244 = scalar_lea.vmem [#allocation9], %s243
          %s245 = smul.u32 2, %s29
          %s247 = ssub.s32 128, 128
          %248 = vsyncadd %s241, %s247
          %s249 = smul.addr %s27, 2
          %s250 = sadd.s32 %s245, %s249
          %s251 = smul.addr %s26, 8
          %s252 = sadd.s32 %s250, %s251
          %s253 = smul.addr %s252, 64
          %s254 = scalar_lea.hbm %s1, %s253
          %s255 = sshll.u32 %s244, 4
          %s256 = int_to_ptr.vmem [resolvable:$true] %s255
          %261 = dma.hbm_to_vmem [thread:$0]  %s254, 128, %s256, %s241, 64, 64, 4
        $region24: #{tpu_custom_call.1} parent=15 // pred_fallthru
          _
        // Predicated region
        $region25: #{tpu_custom_call.1} parent=15 // pred_check
          %p262 = pneg %p129
        $region26: #{tpu_custom_call.1} parent=15 // pred_check_branch
          %264 = sbr.rel (%p262) target = $region28
        $region27: #{tpu_custom_call.1} parent=15 // pred_region
          %s265 = sand.u32 %s19, 1
          %s266 = scalar_lea.sflag [#allocation10], %s265
          %s267 = sand.u32 %s119, 1
          %s268 = smul.addr %s267, 8
          %s269 = scalar_lea.vmem [#allocation11], %s268
          %s270 = smul.u32 2, %s29
          %s272 = ssub.s32 128, 128
          %273 = vsyncadd %s266, %s272
          %s274 = smul.addr %s27, 2
          %s275 = sadd.s32 %s270, %s274
          %s276 = smul.addr %s26, 8
          %s277 = sadd.s32 %s275, %s276
          %s278 = smul.addr %s277, 64
          %s279 = scalar_lea.hbm %s2, %s278
          %s280 = sshll.u32 %s269, 4
          %s281 = int_to_ptr.vmem [resolvable:$true] %s280
          %286 = dma.hbm_to_vmem [thread:$0]  %s279, 128, %s281, %s266, 64, 64, 4
        $region28: #{tpu_custom_call.1} parent=15 // pred_fallthru
          _
        // Predicated region
        $region29: #{tpu_custom_call.1} parent=15 // pred_check
          %p287 = pneg %p157
        $region30: #{tpu_custom_call.1} parent=15 // pred_check_branch
          %289 = sbr.rel (%p287) target = $region32
        $region31: #{tpu_custom_call.1} parent=15 // pred_region
          %p290 = scmp.lt.s32.totalorder %s26, 1
          %s291 = scalar_select %p290, %s26, 1
          %p292 = scmp.lt.s32.totalorder %s29, 0
          %s293 = scalar_select %p292, %s29, 0
          %s294 = sadd.s32 %s293, %s291
          %s295 = scalar_lea.vmem %s3, %s294
        $region32: #{tpu_custom_call.1} parent=15 // pred_fallthru
          _
      $region16: #{tpu_custom_call.1} parent=5 // pred_fallthru
        _
      %p296 = scmp.le.s32.totalorder 1, %s19
      %p297 = scmp.lt.s32.totalorder %s19, 9
      %p298 = pnand %p296, %p297
      %p299 = pneg %p298
      // Predicated region
      $region33: #{tpu_custom_call.1} parent=5 // pred_check
        _
      $region34: #{tpu_custom_call.1} parent=5 // pred_check_branch
        %301 = sbr.rel (%p298) target = $region36
      $region35: #{tpu_custom_call.1} parent=5 // pred_region
        %s302 = ssub.s32 %s19, 1
        %s303 = sand.u32 %s62, 1
        %s304 = scalar_lea.sflag [#allocation7], %s303
        %s305 = sand.u32 %s62, 1
        %s306 = smul.addr %s305, 8
        %s307 = scalar_lea.vmem [#allocation6], %s306
        // Predicated region
        $region37: #{tpu_custom_call.1} parent=35 // pred_check
          %p308 = pneg %p75
        $region38: #{tpu_custom_call.1} parent=35 // pred_check_branch
          %310 = sbr.rel (%p308) target = $region40
        $region39: #{tpu_custom_call.1} parent=35 // pred_region
          %311 = dma.done %s304, 128
        $region40: #{tpu_custom_call.1} parent=35 // pred_fallthru
          _
        %s312 = sand.u32 %s24, 1
        %s313 = scalar_lea.sflag [#allocation10], %s312
        %s314 = sand.u32 %s92, 1
        %s315 = smul.addr %s314, 8
        %s316 = scalar_lea.vmem [#allocation9], %s315
        // Predicated region
        $region41: #{tpu_custom_call.1} parent=35 // pred_check
          %p317 = pneg %p105
        $region42: #{tpu_custom_call.1} parent=35 // pred_check_branch
          %319 = sbr.rel (%p317) target = $region44
        $region43: #{tpu_custom_call.1} parent=35 // pred_region
          %320 = dma.done %s313, 128
        $region44: #{tpu_custom_call.1} parent=35 // pred_fallthru
          _
        %s321 = sand.u32 %s24, 1
        %s322 = scalar_lea.sflag [#allocation10], %s321
        %s323 = sand.u32 %s122, 1
        %s324 = smul.addr %s323, 8
        %s325 = scalar_lea.vmem [#allocation11], %s324
        // Predicated region
        $region45: #{tpu_custom_call.1} parent=35 // pred_check
          %p326 = pneg %p135
        $region46: #{tpu_custom_call.1} parent=35 // pred_check_branch
          %328 = sbr.rel (%p326) target = $region48
        $region47: #{tpu_custom_call.1} parent=35 // pred_region
          %329 = dma.done %s322, 128
        $region48: #{tpu_custom_call.1} parent=35 // pred_fallthru
          _
        %s330 = sand.u32 %s62, 1
        %s331 = scalar_lea.sflag [#allocation7], %s330
        %s332 = sand.u32 %s62, 1
        %s333 = smul.addr %s332, 8
        %s334 = scalar_lea.vmem [#allocation6], %s333
        %p335 = pneg %p75
        %p336 = pneg %p72
        %s337 = sand.u32 %s24, 1
        %s338 = scalar_lea.sflag [#allocation10], %s337
        %s339 = sand.u32 %s92, 1
        %s340 = smul.addr %s339, 8
        %s341 = scalar_lea.vmem [#allocation9], %s340
        %p342 = pneg %p105
        %p343 = pneg %p102
        %s344 = sand.u32 %s24, 1
        %s345 = scalar_lea.sflag [#allocation10], %s344
        %s346 = sand.u32 %s122, 1
        %s347 = smul.addr %s346, 8
        %s348 = scalar_lea.vmem [#allocation11], %s347
        %p349 = pneg %p135
        %p350 = pneg %p132
        %p351 = scmp.lt.s32.totalorder %s30, 1
        %s352 = scalar_select %p351, %s30, 1
        %p353 = scmp.lt.s32.totalorder %s33, 0
        %s354 = scalar_select %p353, %s33, 0
        %s355 = sadd.s32 %s354, %s352
        %s356 = scalar_lea.vmem %s3, %s355
        %p357 = pneg %p163
        %p358 = pneg %p160
        %p359 = pneg %p193
        %p360 = pneg %p190
        %s361 = sand.u32 %s180, 1
        %s362 = scalar_lea.sflag [#allocation8], %s361
        %s363 = sand.u32 %s180, 1
        %s364 = smul.addr %s363, 16
        %s365 = scalar_lea.vmem [#allocation12], %s364
        %s366 = smul.u32 2, %s32
        %s367 = smul.u32 2, %s33
        %s368 = smul.u32 2, %s33
        %p369 = scmp.lt.s32.totalorder %s30, 1
        %s370 = scalar_select %p369, %s30, 1
        %p371 = scmp.lt.s32.totalorder %s33, 0
        %s372 = scalar_select %p371, %s33, 0
        %s373 = sadd.s32 %s372, %s370
        %s374 = scalar_lea.vmem %s3, %s373
        %s375 = smul.u32 2, %s32
        %p378 = scmp.eq.s32.totalorder %s33, 0
        // Predicated region
        $region49: #{tpu_custom_call.1} parent=35 // pred_check
          %p379 = pneg %p378
        $region50: #{tpu_custom_call.1} parent=35 // pred_check_branch
          %381 = sbr.rel (%p379) target = $region52
        $region51: #{tpu_custom_call.1} parent=35 // pred_region
          %v382 = vld [vmem:[%s307] sm:$0xf]
          %v383 = vld [vmem:[%s307 + $0x4] sm:$0xf]
          %v384 = vmul.bf16 %v382, 1043676725
          %v385 = vmul.bf16 %v383, 1043676725
          %v388 = vunpack.c.l.b16 %v384
          %v389 = vunpack.c.l.b16 %v385
          %v390 = vpack.c.b16 %v389, %v388
          %vm392 = vcmask 261120
          %393 = vst.msk [vmem:[#allocation2] sm:$0xff] %vm392, %v390
          %vm394 = vcmask 7168
          %395 = vst.msk [vmem:[#allocation3] sm:$0xff] %vm394, -1e+30
          %396 = vst.msk [vmem:[#allocation3 + $0x8] sm:$0xff] %vm394, -1e+30
          %397 = vst.msk [vmem:[#allocation4] sm:$0xff] %vm394, 0.0
          %398 = vst.msk [vmem:[#allocation4 + $0x8] sm:$0xff] %vm394, 0.0
          %399 = vst.msk [vmem:[#allocation5] sm:$0xff] %vm392, 0.0
          %400 = vst.msk [vmem:[#allocation5 + $0x8] sm:$0xff] %vm392, 0.0
        $region52: #{tpu_custom_call.1} parent=35 // pred_fallthru
          _
        %v401 = vld [vmem:[#allocation2] sm:$0xff]
        %v402 = vld [vmem:[%s316] sm:$0xf]
        %v403 = vld [vmem:[%s316 + $0x4] sm:$0xf]
        %v404 = vld [vmem:[%s374] sm:$0x1]
        %v406 = vlaneseq
        %v407 = vshrl.u32 %v406, 7
        %v408 = vsub.s32 0, %v407
        %v409 = vrot.slane %v404, %v408
        %v413 = vunpack.c.l.b16 %v402
        %v414 = vunpack.c.l.b16 %v403
        %v415 = vpack.c.b16 %v414, %v413
        %vm416 = vcmask 261120
        %v418 = vsel %vm416, %v401, 0
        %v421 = vsel %vm416, %v415, 0
        %423 = vmatprep.subr.bf16.mxu0 0
        %424 = vmatpush1.bf16.xpose.msra.mxu0 %v421
        %425 = vmatprep.subr.bf16.mxu0 0
        %426 = vmatpush1.bf16.xpose.msra.mxu0 0
        %427 = vmatprep.subr.bf16.mxu0 0
        %428 = vmatpush1.bf16.xpose.msra.mxu0 0
        %429 = vmatprep.subr.bf16.mxu0 0
        %430 = vmatpush1.bf16.xpose.msra.mxu0 0
        %431 = vmatprep.subr.bf16.mxu0 0
        %432 = vmatpush1.bf16.xpose.msra.mxu0 0
        %433 = vmatprep.subr.bf16.mxu0 0
        %434 = vmatpush1.bf16.xpose.msra.mxu0 0
        %435 = vmatprep.subr.bf16.mxu0 0
        %436 = vmatpush1.bf16.xpose.msra.mxu0 0
        %437 = vmatprep.subr.bf16.mxu0 0
        %438 = vmatpush1.bf16.xpose.msra.mxu0 0
        %439 = vmatprep.subr.bf16.mxu0 0
        %440 = vmatpush1.bf16.xpose.msra.mxu0 0
        %441 = vmatprep.subr.bf16.mxu0 0
        %442 = vmatpush1.bf16.xpose.msra.mxu0 0
        %443 = vmatprep.subr.bf16.mxu0 0
        %444 = vmatpush1.bf16.xpose.msra.mxu0 0
        %445 = vmatprep.subr.bf16.mxu0 0
        %446 = vmatpush1.bf16.xpose.msra.mxu0 0
        %447 = vmatprep.subr.bf16.mxu0 0
        %448 = vmatpush1.bf16.xpose.msra.mxu0 0
        %449 = vmatprep.subr.bf16.mxu0 0
        %450 = vmatpush1.bf16.xpose.msra.mxu0 0
        %451 = vmatprep.subr.bf16.mxu0 0
        %452 = vmatpush1.bf16.xpose.msra.mxu0 0
        %453 = vmatprep.subr.bf16.mxu0 0
        %454 = vmatpush1.bf16.xpose.msra.mxu0 0
        %455 = vmatprep.mubr.bf16.mxu0 0
        %456 = vmatmul.mubr.bf16.gmra.mrb[0].mxu0 %v418
        %v457 = vpop.f32.mrb[0].mxu0
        %v458 = vadd.f32 %v409, %v457
        %v459 = vpop.f32.mrb[0].mxu0
        %v460 = vpop.f32.mrb[0].mxu0
        %v461 = vadd.f32 %v409, %v460
        %v462 = vpop.f32.mrb[0].mxu0
        %463 = vdwg.mxu0
        %v464 = vld [vmem:[#allocation3] sm:$0xff]
        %v465 = vld [vmem:[#allocation3 + $0x8] sm:$0xff]
        %vm466 = vcmask 130048
        %v467 = vsel %vm466, %v458, -inf
        %468 = vmax.xlane.f32.xlu0 %v467
        %v469 = vpop.xlane.xlu0 %468
        %v470 = vsel %vm466, %v461, -inf
        %471 = vmax.xlane.f32.xlu0 %v470
        %v472 = vpop.xlane.xlu0 %471
        %v473 = vmax.f32 %v464, %v469
        %v474 = vmax.f32 %v465, %v472
        %v475 = vsub.f32 %v464, %v473
        %v476 = vsub.f32 %v465, %v474
        %v477 = vmul.f32 %v475, 1.442695
        %v478 = vpow.pop %v477
        %v479 = vmul.f32 %v476, 1.442695
        %v480 = vpow.pop %v479
        %482 = vset.pattern.permute.xlu0 0
        %483 = vperm.xlu0 %482, %v473
        %v484 = vpop.permute.xlu0 %483
        %487 = vset.pattern.permute.xlu0 0
        %488 = vperm.xlu0 %487, %v474
        %v489 = vpop.permute.xlu0 %488
        %v491 = vsub.f32 %v458, %v484
        %v492 = vsub.f32 %v461, %v489
        %v493 = vmul.f32 %v491, 1.442695
        %v494 = vpow.pop %v493
        %v495 = vmul.f32 %v492, 1.442695
        %v496 = vpow.pop %v495
        %v497 = vld [vmem:[#allocation4] sm:$0xff]
        %v498 = vld [vmem:[#allocation4 + $0x8] sm:$0xff]
        %v499 = vmul.f32 %v478, %v497
        %v500 = vmul.f32 %v480, %v498
        %v501 = vsel %vm466, %v494, 0.0
        %502 = vadd.xlane.f32.xlu0 %v501
        %v503 = vpop.xlane.xlu0 %502
        %v504 = vsel %vm466, %v496, 0.0
        %505 = vadd.xlane.f32.xlu0 %v504
        %v506 = vpop.xlane.xlu0 %505
        %v507 = vadd.f32 %v499, %v503
        %v508 = vadd.f32 %v500, %v506
        %vm509 = vcmask 7168
        %510 = vst.msk [vmem:[#allocation4] sm:$0xff] %vm509, %v507
        %511 = vst.msk [vmem:[#allocation4 + $0x8] sm:$0xff] %vm509, %v508
        %v512 = vld [vmem:[#allocation5] sm:$0xff]
        %v513 = vld [vmem:[#allocation5 + $0x8] sm:$0xff]
        %515 = vset.pattern.permute.xlu0 0
        %516 = vperm.xlu0 %515, %v478
        %v517 = vpop.permute.xlu0 %516
        %520 = vset.pattern.permute.xlu0 0
        %521 = vperm.xlu0 %520, %v480
        %v522 = vpop.permute.xlu0 %521
        %v524 = vmul.f32 %v517, %v512
        %v525 = vmul.f32 %v522, %v513
        %v526 = vpack.c.bf16 %v496, %v494
        %v527 = vld [vmem:[%s325] sm:$0xf]
        %v528 = vld [vmem:[%s325 + $0x4] sm:$0xf]
        %v531 = vunpack.c.l.b16 %v527
        %v532 = vunpack.c.l.b16 %v528
        %v533 = vpack.c.b16 %v532, %v531
        %v536 = vsel %vm466, %v526, 0
        %538 = vmatprep.subr.bf16.mxu0 0
        %539 = vmatpush1.bf16.msra.mxu0 %v533
        %540 = vmatprep.subr.bf16.mxu0 0
        %541 = vmatpush1.bf16.msra.mxu0 0
        %542 = vmatprep.subr.bf16.mxu0 0
        %543 = vmatpush1.bf16.msra.mxu0 0
        %544 = vmatprep.subr.bf16.mxu0 0
        %545 = vmatpush1.bf16.msra.mxu0 0
        %546 = vmatprep.subr.bf16.mxu0 0
        %547 = vmatpush1.bf16.msra.mxu0 0
        %548 = vmatprep.subr.bf16.mxu0 0
        %549 = vmatpush1.bf16.msra.mxu0 0
        %550 = vmatprep.subr.bf16.mxu0 0
        %551 = vmatpush1.bf16.msra.mxu0 0
        %552 = vmatprep.subr.bf16.mxu0 0
        %553 = vmatpush1.bf16.msra.mxu0 0
        %554 = vmatprep.subr.bf16.mxu0 0
        %555 = vmatpush1.bf16.msra.mxu0 0
        %556 = vmatprep.subr.bf16.mxu0 0
        %557 = vmatpush1.bf16.msra.mxu0 0
        %558 = vmatprep.subr.bf16.mxu0 0
        %559 = vmatpush1.bf16.msra.mxu0 0
        %560 = vmatprep.subr.bf16.mxu0 0
        %561 = vmatpush1.bf16.msra.mxu0 0
        %562 = vmatprep.subr.bf16.mxu0 0
        %563 = vmatpush1.bf16.msra.mxu0 0
        %564 = vmatprep.subr.bf16.mxu0 0
        %565 = vmatpush1.bf16.msra.mxu0 0
        %566 = vmatprep.subr.bf16.mxu0 0
        %567 = vmatpush1.bf16.msra.mxu0 0
        %568 = vmatprep.subr.bf16.mxu0 0
        %569 = vmatpush1.bf16.msra.mxu0 0
        %570 = vmatprep.mubr.bf16.mxu0 0
        %571 = vmatmul.mubr.bf16.gmra.mrb[0].mxu0 %v536
        %v572 = vpop.f32.mrb[0].mxu0
        %v573 = vadd.f32 0.0, %v572
        %v574 = vpop.f32.mrb[0].mxu0
        %v575 = vpop.f32.mrb[0].mxu0
        %v576 = vadd.f32 0.0, %v575
        %v577 = vpop.f32.mrb[0].mxu0
        %578 = vdwg.mxu0
        %v579 = vadd.f32 %v524, %v573
        %v580 = vadd.f32 %v525, %v576
        %581 = vst.msk [vmem:[#allocation5] sm:$0xff] %vm416, %v579
        %582 = vst.msk [vmem:[#allocation5 + $0x8] sm:$0xff] %vm416, %v580
        %583 = vst.msk [vmem:[#allocation3] sm:$0xff] %vm509, %v473
        %584 = vst.msk [vmem:[#allocation3 + $0x8] sm:$0xff] %vm509, %v474
        // Predicated region
        $region53: #{tpu_custom_call.1} parent=35 // pred_check
          %p585 = pneg %p378
        $region54: #{tpu_custom_call.1} parent=35 // pred_check_branch
          %587 = sbr.rel (%p585) target = $region56
        $region55: #{tpu_custom_call.1} parent=35 // pred_region
          %v588 = vld [vmem:[#allocation5] sm:$0xff]
          %v589 = vld [vmem:[#allocation5 + $0x8] sm:$0xff]
          %v590 = vld [vmem:[#allocation4] sm:$0xff]
          %v591 = vld [vmem:[#allocation4 + $0x8] sm:$0xff]
          %593 = vset.pattern.permute.xlu0 0
          %594 = vperm.xlu0 %593, %v590
          %v595 = vpop.permute.xlu0 %594
          %598 = vset.pattern.permute.xlu0 0
          %599 = vperm.xlu0 %598, %v591
          %v600 = vpop.permute.xlu0 %599
          %v602 = vrcp.pop %v595
          %v603 = vmul.f32 %v588, %v602
          %v604 = vrcp.pop %v600
          %v605 = vmul.f32 %v589, %v604
          %606 = vst.msk [vmem:[%s365] sm:$0xff] %vm416, %v603
          %607 = vst.msk [vmem:[%s365 + $0x8] sm:$0xff] %vm416, %v605
        $region56: #{tpu_custom_call.1} parent=35 // pred_fallthru
          _
        %s608 = sand.u32 %s180, 1
        %s609 = scalar_lea.sflag [#allocation8], %s608
        %s610 = sand.u32 %s180, 1
        %s611 = smul.addr %s610, 16
        %s612 = scalar_lea.vmem [#allocation12], %s611
        // Predicated region
        $region57: #{tpu_custom_call.1} parent=35 // pred_check
          %p613 = pneg %p190
        $region58: #{tpu_custom_call.1} parent=35 // pred_check_branch
          %615 = sbr.rel (%p613) target = $region60
        $region59: #{tpu_custom_call.1} parent=35 // pred_region
          %s616 = smul.u32 2, %s32
          %s618 = ssub.s32 256, 256
          %619 = vsyncadd %s609, %s618
          %s620 = smul.addr %s31, 2
          %s621 = sadd.s32 %s616, %s620
          %s622 = smul.addr %s30, 8
          %s623 = sadd.s32 %s621, %s622
          %s624 = smul.addr %s623, 128
          %s625 = scalar_lea.hbm %s4, %s624
          %s626 = sshll.u32 %s612, 4
          %s627 = int_to_ptr.vmem [resolvable:$true] %s626
          %632 = dma.vmem_to_hbm [thread:$0]  %s627, 256, %s625, %s609, 128, 128, 8
        $region60: #{tpu_custom_call.1} parent=35 // pred_fallthru
          _
      $region36: #{tpu_custom_call.1} parent=5 // pred_fallthru
        _
      %p633 = scmp.le.s32.totalorder 2, %s19
      // Predicated region
      $region61: #{tpu_custom_call.1} parent=5 // pred_check
        %p634 = pneg %p633
      $region62: #{tpu_custom_call.1} parent=5 // pred_check_branch
        %636 = sbr.rel (%p634) target = $region64
      $region63: #{tpu_custom_call.1} parent=5 // pred_region
        %s637 = ssub.s32 %s19, 2
        // Predicated region
        $region65: #{tpu_custom_call.1} parent=63 // pred_check
          %p638 = pneg %p196
        $region66: #{tpu_custom_call.1} parent=63 // pred_check_branch
          %640 = sbr.rel (%p638) target = $region68
        $region67: #{tpu_custom_call.1} parent=63 // pred_region
          %s641 = sand.u32 %s181, 1
          %s642 = scalar_lea.sflag [#allocation8], %s641
          %s643 = sand.u32 %s181, 1
          %s644 = smul.addr %s643, 16
          %s645 = scalar_lea.vmem [#allocation12], %s644
          %646 = dma.done %s642, 256
        $region68: #{tpu_custom_call.1} parent=63 // pred_fallthru
          _
      $region64: #{tpu_custom_call.1} parent=5 // pred_fallthru
        _
    $region6: #{tpu_custom_call.1} parent=1 // loop_footer
      %s23 = sadd.s32 1, %s19
    $region7: #{tpu_custom_call.1} parent=1 // loop_footer_branch
      %18 = sbr.rel target = $region3
    $region8: #{tpu_custom_call.1} parent=1 // loop_exit
      _
    %647 = vsyncpa [#allocation7], 1
    %s648 = scalar_lea.sflag [#allocation7], 1
    %649 = vsyncpa %s648, 1
    %650 = vsyncpa [#allocation10], 1
    %s651 = scalar_lea.sflag [#allocation10], 1
    %652 = vsyncpa %s651, 1
    %653 = vsyncpa [#allocation8], 1
    %s654 = scalar_lea.sflag [#allocation8], 1
    %655 = vsyncpa %s654, 1

</llo_original>
